<compile_context>
chip_gen: v5e
topology: v5e:2x2
jax: 0.10.0
libtpu: 0.0.40
codegen_flags: <defaults>
</compile_context>

<pallas_src>
import jax
import jax.numpy as jnp
from jax.experimental import pallas as pl
from jax.experimental.pallas import tpu as pltpu


LANE = 128  # TPU lane width; last block dim is always a multiple of this.


def _fusion_kernel(off_ref, len_ref, x_ref, o_ref):
    """Segment max over the agent axis.

    grid = (B, n_tiles, max_len); axis 2 is the reduction step.
    x_ref : (1, tile_r, LANE) tile of one agent's flattened feature map.
    o_ref : (1, tile_r, LANE) accumulator tile for the current (group, tile);
            resident across the reduction axis (its index_map ignores k).
    off_ref / len_ref are scalar-prefetch SMEM refs consumed by the
    index_maps, not in the body.
    """
    k = pl.program_id(2)

    @pl.when(k == 0)
    def _():
        o_ref[...] = x_ref[...]

    @pl.when(k > 0)
    def _():
        o_ref[...] = jnp.maximum(o_ref[...], x_ref[...])


def spatial_fusion(x, record_len, *, target_tile_bytes=2 * 1024 * 1024):
    """x: (N, C, H, W) jnp array; record_len: static python sequence of ints.

    target_tile_bytes sizes the per-step input block (~2 MiB default keeps
    double-buffered input + resident output within the scoped-VMEM default on
    every TPU generation, including v7x's 64 MiB physical VMEM).
    """
    N, C, H, W = x.shape
    record_len = [int(r) for r in record_len]
    assert sum(record_len) == N, "record_len must sum to the agent count"
    assert all(r >= 1 for r in record_len), "empty groups are not supported"
    B = len(record_len)
    max_len = max(record_len)

    # ---- lane-dense layout: flatten each agent's map to (rows, LANE) -------
    F = C * H * W
    rows = -(-F // LANE)                      # rows of 128 lanes needed
    itemsize = jnp.dtype(x.dtype).itemsize
    # tile rows: multiple of 8 (sublane), ~target_tile_bytes per block.
    target_rows = max(8, (target_tile_bytes // (LANE * itemsize)) // 8 * 8)
    rows8 = -(-rows // 8) * 8
    tile_r = max(8, min(target_rows, rows8))
    rows_pad = -(-rows // tile_r) * tile_r    # pad so tiles divide evenly
    F_pad = rows_pad * LANE
    n_tiles = rows_pad // tile_r

    x_flat = x.reshape(N, F)
    if F_pad != F:
        # Feature-axis padding only (never agent-axis padding); the padded
        # tail is sliced off after the kernel, so the pad value is irrelevant.
        x_flat = jnp.pad(x_flat, ((0, 0), (0, F_pad - F)))
    x3 = x_flat.reshape(N, rows_pad, LANE)

    lens = jnp.asarray(record_len, dtype=jnp.int32)
    offs = jnp.concatenate(
        [jnp.zeros((1,), jnp.int32), jnp.cumsum(lens)[:-1].astype(jnp.int32)]
    )

    def x_index_map(b, t, k, off_ref, len_ref):
        # Clamp k to the group's length: out-of-range steps re-read the last
        # agent of the group (Pallas skips the re-DMA on a repeated block
        # index, and the redundant max leaves the accumulator unchanged).
        kk = jnp.maximum(jnp.minimum(k, len_ref[b] - 1), 0)
        return (off_ref[b] + kk, t, 0)

    def o_index_map(b, t, k, off_ref, len_ref):
        return (b, t, 0)

    grid_spec = pltpu.PrefetchScalarGridSpec(
        num_scalar_prefetch=2,
        grid=(B, n_tiles, max_len),
        in_specs=[pl.BlockSpec((1, tile_r, LANE), x_index_map)],
        out_specs=pl.BlockSpec((1, tile_r, LANE), o_index_map),
    )

    out3 = pl.pallas_call(
        _fusion_kernel,
        out_shape=jax.ShapeDtypeStruct((B, rows_pad, LANE), x.dtype),
        grid_spec=grid_spec,
        compiler_params=pltpu.CompilerParams(
            # group axis and spatial-tile axis are independent (megacore can
            # shard them); the agent/reduction axis must stay "arbitrary".
            dimension_semantics=("parallel", "parallel", "arbitrary"),
        ),
    )(offs, lens, x3)

    return out3.reshape(B, F_pad)[:, :F].reshape(B, C, H, W)


def spatial_fusion_forward(x, record_len):
    """Full forward matching the PyTorch module: x is (1, N, C, H, W)."""
    x = jnp.squeeze(x, axis=0)          # glue: squeeze(0)
    return spatial_fusion(x, record_len)


def _reference(x, record_len):
    x = jnp.squeeze(x, axis=0)
    outs = []
    start = 0
    for r in record_len:
        outs.append(jnp.max(x[start:start + r], axis=0, keepdims=True))
        start += r
    return jnp.concatenate(outs, axis=0)


if __name__ == "__main__":
    key = jax.random.PRNGKey(0)

    # Test 1: small shapes matching the module's forward: 2 groups (2 and 3
    # agents), C=4, H=W=16. rows == 8 -> single spatial tile.
    record_len = [2, 3]
    N = sum(record_len)
    C, H, W = 4, 16, 16
    x = jax.random.normal(key, (1, N, C, H, W), dtype=jnp.float32)

    out = spatial_fusion_forward(x, record_len)
    out = jax.block_until_ready(out)
    ref = _reference(x, record_len)
    assert out.shape == (len(record_len), C, H, W)
    assert jnp.allclose(out, ref), "Pallas output mismatch vs reference (test 1)"

    # Test 2: exercise feature-axis padding (W not a multiple of 128) and the
    # multi-tile path (tiny forced tile) with a group of size 1.
    record_len2 = [1, 2, 1]
    N2 = sum(record_len2)
    C2, H2, W2 = 8, 16, 12
    x2 = jax.random.normal(jax.random.PRNGKey(0), (1, N2, C2, H2, W2),
                           dtype=jnp.float32)
    out2 = spatial_fusion(jnp.squeeze(x2, axis=0), record_len2,
                          target_tile_bytes=8 * LANE * 4)  # force n_tiles > 1
    out2 = jax.block_until_ready(out2)
    ref2 = _reference(x2, record_len2)
    assert out2.shape == (len(record_len2), C2, H2, W2)
    assert jnp.allclose(out2, ref2), "Pallas output mismatch vs reference (test 2)"

    print("KERNEL_OK")
</pallas_src>

<mosaic_0001>
module attributes {stable_mosaic.version = 11 : i64} {
  func.func @_fusion_kernel(%arg0: i32, %arg1: i32, %arg2: i32, %arg3: memref<2xi32, #tpu.memory_space<smem>>, %arg4: memref<2xi32, #tpu.memory_space<smem>>, %arg5: memref<1x8x128xf32, #tpu.memory_space<vmem>>, %arg6: memref<1x8x128xf32, #tpu.memory_space<vmem>>) attributes {dimension_semantics = [#tpu.dimension_semantics<parallel>, #tpu.dimension_semantics<parallel>, #tpu.dimension_semantics<arbitrary>], iteration_bounds = array<i64: 2, 1, 3>, scalar_prefetch = 2 : i64, scratch_operands = 0 : i64, tpu.core_type = #tpu.core_type<tc>, window_params = [{transform_indices = @transform_0, window_bounds = array<i64: 1, 8, 128>}, {transform_indices = @transform_1, window_bounds = array<i64: 1, 8, 128>}]} {
    %c0_i32 = arith.constant 0 : i32
    %0 = arith.cmpi eq, %arg2, %c0_i32 : i32
    %1 = arith.extui %0 : i1 to i32
    %c0_i32_0 = arith.constant 0 : i32
    %2 = arith.cmpi ne, %1, %c0_i32_0 : i32
    scf.if %2 {
      %c0 = arith.constant 0 : index
      %c0_3 = arith.constant 0 : index
      %c0_4 = arith.constant 0 : index
      %6 = vector.load %arg5[%c0, %c0_3, %c0_4] : memref<1x8x128xf32, #tpu.memory_space<vmem>>, vector<1x8x128xf32>
      %c0_5 = arith.constant 0 : index
      %c0_6 = arith.constant 0 : index
      %c0_7 = arith.constant 0 : index
      %7 = vector.load %arg6[%c0_5, %c0_6, %c0_7] : memref<1x8x128xf32, #tpu.memory_space<vmem>>, vector<1x8x128xf32>
      tpu.vector_store %arg6[%c0_5, %c0_6, %c0_7], %6 {strides = array<i32>} : memref<1x8x128xf32, #tpu.memory_space<vmem>>, vector<1x8x128xf32>,
    } else {
    }
    %c0_i32_1 = arith.constant 0 : i32
    %3 = arith.cmpi sgt, %arg2, %c0_i32_1 : i32
    %4 = arith.extui %3 : i1 to i32
    %c0_i32_2 = arith.constant 0 : i32
    %5 = arith.cmpi ne, %4, %c0_i32_2 : i32
    scf.if %5 {
      %c0 = arith.constant 0 : index
      %c0_3 = arith.constant 0 : index
      %c0_4 = arith.constant 0 : index
      %6 = vector.load %arg6[%c0, %c0_3, %c0_4] : memref<1x8x128xf32, #tpu.memory_space<vmem>>, vector<1x8x128xf32>
      %c0_5 = arith.constant 0 : index
      %c0_6 = arith.constant 0 : index
      %c0_7 = arith.constant 0 : index
      %7 = vector.load %arg5[%c0_5, %c0_6, %c0_7] : memref<1x8x128xf32, #tpu.memory_space<vmem>>, vector<1x8x128xf32>
      %8 = arith.maximumf %6, %7 : vector<1x8x128xf32>
      %c0_8 = arith.constant 0 : index
      %c0_9 = arith.constant 0 : index
      %c0_10 = arith.constant 0 : index
      %9 = vector.load %arg6[%c0_8, %c0_9, %c0_10] : memref<1x8x128xf32, #tpu.memory_space<vmem>>, vector<1x8x128xf32>
      tpu.vector_store %arg6[%c0_8, %c0_9, %c0_10], %8 {strides = array<i32>} : memref<1x8x128xf32, #tpu.memory_space<vmem>>, vector<1x8x128xf32>,
    } else {
    }
    return
  }
  func.func @transform_0(%arg0: i32, %arg1: i32, %arg2: i32, %arg3: memref<2xi32, #tpu.memory_space<smem>>, %arg4: memref<2xi32, #tpu.memory_space<smem>>) -> (i32, i32, i32) {
    %0 = arith.index_cast %arg0 : i32 to index
    %1 = memref.load %arg4[%0] : memref<2xi32, #tpu.memory_space<smem>>
    %c1_i32 = arith.constant 1 : i32
    %2 = arith.subi %1, %c1_i32 : i32
    %3 = arith.minsi %arg2, %2 : i32
    %c0_i32 = arith.constant 0 : i32
    %4 = arith.maxsi %3, %c0_i32 : i32
    %5 = arith.index_cast %arg0 : i32 to index
    %6 = memref.load %arg3[%5] : memref<2xi32, #tpu.memory_space<smem>>
    %7 = arith.addi %6, %4 : i32
    %c0_i32_0 = arith.constant 0 : i32
    %c0_i32_1 = arith.constant 0 : i32
    return %7, %arg1, %c0_i32_0 : i32, i32, i32
  }
  func.func @transform_1(%arg0: i32, %arg1: i32, %arg2: i32, %arg3: memref<2xi32, #tpu.memory_space<smem>>, %arg4: memref<2xi32, #tpu.memory_space<smem>>) -> (i32, i32, i32) {
    %c0_i32 = arith.constant 0 : i32
    %c0_i32_0 = arith.constant 0 : i32
    return %arg0, %arg1, %c0_i32 : i32, i32, i32
  }
}

</mosaic_0001>

<llo_original>
// kernel: tpu_custom_call.1
$region0: #{tpu_custom_call.1}
  #allocation0 [shape = 'u32[]', space=smem, size = 0x4, offset = 0x4, fixed_abs, tag = 'smem constant byte address 0x4 - core index']
  #allocation1 [shape = 'u32[72,128]{1,0:T(1,128)}', space=vmem, size = 0x9000, scoped, tag = 'internal scratch']
  #allocation2 [shape = 's32[1]{0}', space=sflag, size = 0x4, scoped, tag = 'scoped memory for tpu_custom_call.1']
  #allocation3 [shape = 'u8[512]{0}', space=smem, size = 0x200, scoped, tag = 'prefetched SMEM operand 0']
  #allocation4 [shape = 'u8[512]{0}', space=smem, size = 0x200, scoped, tag = 'prefetched SMEM operand 1']
  %s0 = inlined_call_operand.hbm [shape: s32[2], index: 0, kind: input, shape index: {}]
  %s1 = inlined_call_operand.hbm [shape: s32[2], index: 1, kind: input, shape index: {}]
  %s2 = inlined_call_operand.hbm [shape: f32[5,8,128], index: 2, kind: input, shape index: {}]
  %s3 = inlined_call_operand.hbm [shape: f32[2,8,128], index: 3, kind: output, shape index: {}]
  %s4 = sld [smem:[#allocation0]]
  $region49: #{tpu_custom_call.1} parent=0
    _
  %s6 = ssub.s32 1, %s4
  %s7 = scalar_select 0, %s6, %s4
  %s9 = sshll.u32 %s0, 4
  %s10 = int_to_ptr.hbm [resolvable:$true] %s9
  %12 = dma.hbm_to_smem %s10, 16, [#allocation3], [#allocation2]
  %s14 = sshll.u32 %s1, 4
  %s15 = int_to_ptr.hbm [resolvable:$true] %s14
  %17 = dma.hbm_to_smem %s15, 16, [#allocation4], [#allocation2]
  %19 = dma.done [#allocation2], 32
  %20 = sfence
  $region1: #{tpu_custom_call.1} parent=0
    #allocation5 [shape = 'u8[8192]{0}', space=vmem, size = 0x2000, scoped, tag = 'input window, operand 2']
    #allocation6 [shape = 's32[2]{0}', space=sflag, size = 0x8, scoped, tag = 'scoped memory for tpu_custom_call.1']
    #allocation7 [shape = 's32[2]{0}', space=sflag, size = 0x8, scoped, tag = 'scoped memory for tpu_custom_call.1']
    #allocation8 [shape = 'u8[8192]{0}', space=vmem, size = 0x2000, scoped, tag = 'output window, operand 0']
    %21 = vsyncpa [#allocation6], 0
    %s22 = scalar_lea.sflag [#allocation6], 1
    %23 = vsyncpa %s22, 0
    %24 = vsyncpa [#allocation7], 0
    %s25 = scalar_lea.sflag [#allocation7], 1
    %26 = vsyncpa %s25, 0
    loop: start=0, step=1, limit=8
    $region2: #{tpu_custom_call.1} parent=1 // loop_pre_header
      _
    $region3: #{tpu_custom_call.1} parent=1 // loop_header
      %s28 = sphi 0, %s32
      %p29 = scmp.ge.s32.totalorder %s28, 8
      %s35 = sphi 0, %s54
      %s36 = sphi 0, %s50
      %s37 = sphi 0, %s46
      %s38 = sphi 0, %s35
      %s39 = sphi 0, %s36
      %s40 = sphi 0, %s37
      %s41 = sphi 0, %s38
      %s42 = sphi 0, %s39
      %s43 = sphi 0, %s40
      %s75 = sphi 0, %s77
      %s78 = sphi 0, %s75
      %s79 = sphi 0, %s78
      %s95 = sphi 0, %s79
      %s103 = sphi 0, %s105
      %s106 = sphi 0, %s103
      %s107 = sphi 0, %s106
      %s123 = sphi 0, %s107
    $region4: #{tpu_custom_call.1} parent=1 // loop_header_branch
      %31 = sbr.rel (%p29) target = $region8
    $region5: #{tpu_custom_call.1} parent=1 // loop_body
      %s33 = ssub.s32 %s28, 1
      %s34 = ssub.s32 %s28, 2
      %s44 = sadd.s32 1, %s37
      %p45 = scmp.ge.s32.totalorder %s44, 3
      %s46 = scalar_select %p45, 0, %s44
      %s47 = sadd.s32 1, %s36
      %s48 = scalar_select %p45, %s47, %s36
      %p49 = scmp.ge.s32.totalorder %s48, 1
      %s50 = scalar_select %p49, 0, %s48
      %s51 = sadd.s32 1, %s35
      %s52 = scalar_select %p49, %s51, %s35
      %p53 = scmp.ge.s32.totalorder %s52, 2
      %s54 = scalar_select %p53, 0, %s52
      %s55 = sld [smem:[#allocation4 + %s35]]
      %s56 = ssub.s32 %s55, 1
      %p57 = scmp.lt.s32.totalorder %s37, %s56
      %s58 = scalar_select %p57, %s37, %s56
      %p59 = scmp.gt.s32.totalorder %s58, 0
      %s60 = scalar_select %p59, %s58, 0
      %s61 = sld [smem:[#allocation3 + %s35]]
      %s62 = sadd.s32 %s61, %s60
      %s63 = sld [smem:[#allocation4 + %s54]]
      %s64 = ssub.s32 %s63, 1
      %p65 = scmp.lt.s32.totalorder %s46, %s64
      %s66 = scalar_select %p65, %s46, %s64
      %p67 = scmp.gt.s32.totalorder %s66, 0
      %s68 = scalar_select %p67, %s66, 0
      %s69 = sld [smem:[#allocation3 + %s54]]
      %s70 = sadd.s32 %s69, %s68
      %s71 = ssub.s32 %s62, %s70
      %s72 = ssub.s32 %s36, %s50
      %s73 = sor.u32 %s71, %s72
      %p74 = scmp.eq.s32.totalorder %s73, 0
      %s76 = sadd.s32 %s75, 1
      %s77 = scalar_select %p74, %s75, %s76
      %p80 = pneg %p74
      %p81 = scmp.eq.s32.totalorder %s28, 5
      %p82 = por %p80, %p81
      %p83 = scmp.ne.s32.totalorder %s75, %s78
      %p84 = scmp.eq.s32.totalorder %s28, 0
      %p85 = por %p83, %p84
      %p86 = scmp.ne.s32.totalorder %s75, %s78
      %p87 = scmp.eq.s32.totalorder %s33, 5
      %p88 = por %p86, %p87
      %p89 = scmp.ne.s32.totalorder %s78, %s79
      %p90 = scmp.eq.s32.totalorder %s33, 0
      %p91 = por %p89, %p90
      %p92 = scmp.ne.s32.totalorder %s78, %s79
      %p93 = scmp.eq.s32.totalorder %s34, 5
      %p94 = por %p92, %p93
      %p96 = scmp.ne.s32.totalorder %s79, %s95
      %p97 = scmp.eq.s32.totalorder %s34, 0
      %p98 = por %p96, %p97
      %s99 = ssub.s32 %s35, %s54
      %s100 = ssub.s32 %s36, %s50
      %s101 = sor.u32 %s99, %s100
      %p102 = scmp.eq.s32.totalorder %s101, 0
      %s104 = sadd.s32 %s103, 1
      %s105 = scalar_select %p102, %s103, %s104
      %p108 = pneg %p102
      %p109 = scmp.eq.s32.totalorder %s28, 5
      %p110 = por %p108, %p109
      %p111 = scmp.ne.s32.totalorder %s103, %s106
      %p112 = scmp.eq.s32.totalorder %s28, 0
      %p113 = por %p111, %p112
      %p114 = scmp.ne.s32.totalorder %s103, %s106
      %p115 = scmp.eq.s32.totalorder %s33, 5
      %p116 = por %p114, %p115
      %p117 = scmp.ne.s32.totalorder %s106, %s107
      %p118 = scmp.eq.s32.totalorder %s33, 0
      %p119 = por %p117, %p118
      %p120 = scmp.ne.s32.totalorder %s106, %s107
      %p121 = scmp.eq.s32.totalorder %s34, 5
      %p122 = por %p120, %p121
      %p124 = scmp.ne.s32.totalorder %s107, %s123
      %p125 = scmp.eq.s32.totalorder %s34, 0
      %p126 = por %p124, %p125
      %p127 = scmp.le.s32.totalorder 1, %s28
      %p128 = scmp.lt.s32.totalorder %s28, 7
      %p129 = pnand %p127, %p128
      %p130 = pneg %p129
      // Predicated region
      $region9: #{tpu_custom_call.1} parent=5 // pred_check
        _
      $region10: #{tpu_custom_call.1} parent=5 // pred_check_branch
        %132 = sbr.rel (%p129) target = $region12
      $region11: #{tpu_custom_call.1} parent=5 // pred_region
        %s133 = ssub.s32 %s28, 1
      $region12: #{tpu_custom_call.1} parent=5 // pred_fallthru
        _
      %p134 = scmp.lt.s32.totalorder %s28, 6
      // Predicated region
      $region13: #{tpu_custom_call.1} parent=5 // pred_check
        %p135 = pneg %p134
      $region14: #{tpu_custom_call.1} parent=5 // pred_check_branch
        %137 = sbr.rel (%p135) target = $region16
      $region15: #{tpu_custom_call.1} parent=5 // pred_region
        // Predicated region
        $region17: #{tpu_custom_call.1} parent=15 // pred_check
          %p138 = pneg %p85
        $region18: #{tpu_custom_call.1} parent=15 // pred_check_branch
          %140 = sbr.rel (%p138) target = $region20
        $region19: #{tpu_custom_call.1} parent=15 // pred_region
          %s141 = sand.u32 %s75, 1
          %s142 = scalar_lea.sflag [#allocation6], %s141
          %s143 = sand.u32 %s75, 1
          %s144 = smul.addr %s143, 8
          %s145 = scalar_lea.vmem [#allocation5], %s144
          %s146 = sld [smem:[#allocation4 + %s35]]
          %s147 = ssub.s32 %s146, 1
          %p148 = scmp.lt.s32.totalorder %s37, %s147
          %s149 = scalar_select %p148, %s37, %s147
          %p150 = scmp.gt.s32.totalorder %s149, 0
          %s151 = scalar_select %p150, %s149, 0
          %s152 = sld [smem:[#allocation3 + %s35]]
          %s153 = sadd.s32 %s152, %s151
          %155 = vsyncadd %s142, 0
          %s156 = sadd.s32 %s36, %s153
          %s157 = smul.addr %s156, 8
          %s158 = scalar_lea.hbm %s2, %s157
          %s160 = sshll.u32 %s158, 4
          %s161 = int_to_ptr.hbm [resolvable:$true] %s160
          %s162 = sshll.u32 %s145, 4
          %s163 = int_to_ptr.vmem [resolvable:$true] %s162
          %165 = dma.hbm_to_vmem [thread:$0]  %s161, 128, %s163, %s142
        $region20: #{tpu_custom_call.1} parent=15 // pred_fallthru
          _
      $region16: #{tpu_custom_call.1} parent=5 // pred_fallthru
        _
      %p166 = scmp.le.s32.totalorder 1, %s28
      %p167 = scmp.lt.s32.totalorder %s28, 7
      %p168 = pnand %p166, %p167
      %p169 = pneg %p168
      // Predicated region
      $region21: #{tpu_custom_call.1} parent=5 // pred_check
        _
      $region22: #{tpu_custom_call.1} parent=5 // pred_check_branch
        %171 = sbr.rel (%p168) target = $region24
      $region23: #{tpu_custom_call.1} parent=5 // pred_region
        %s172 = ssub.s32 %s28, 1
        %s173 = sand.u32 %s78, 1
        %s174 = scalar_lea.sflag [#allocation6], %s173
        %s175 = sand.u32 %s78, 1
        %s176 = smul.addr %s175, 8
        %s177 = scalar_lea.vmem [#allocation5], %s176
        // Predicated region
        $region25: #{tpu_custom_call.1} parent=23 // pred_check
          %p178 = pneg %p91
        $region26: #{tpu_custom_call.1} parent=23 // pred_check_branch
          %180 = sbr.rel (%p178) target = $region28
        $region27: #{tpu_custom_call.1} parent=23 // pred_region
          %182 = dma.done %s174, 128
        $region28: #{tpu_custom_call.1} parent=23 // pred_fallthru
          _
        %s183 = sand.u32 %s78, 1
        %s184 = scalar_lea.sflag [#allocation6], %s183
        %s185 = sand.u32 %s78, 1
        %s186 = smul.addr %s185, 8
        %s187 = scalar_lea.vmem [#allocation5], %s186
        %p188 = pneg %p91
        %p189 = pneg %p88
        %p190 = pneg %p119
        %p191 = pneg %p116
        %s192 = sand.u32 %s106, 1
        %s193 = scalar_lea.sflag [#allocation7], %s192
        %s194 = sand.u32 %s106, 1
        %s195 = smul.addr %s194, 8
        %s196 = scalar_lea.vmem [#allocation8], %s195
        %s197 = sld [smem:[#allocation4 + %s38]]
        %s198 = ssub.s32 %s197, 1
        %p199 = scmp.lt.s32.totalorder %s40, %s198
        %s200 = scalar_select %p199, %s40, %s198
        %p201 = scmp.gt.s32.totalorder %s200, 0
        %s202 = scalar_select %p201, %s200, 0
        %s203 = sld [smem:[#allocation3 + %s38]]
        %s204 = sadd.s32 %s203, %s202
        %p205 = scmp.eq.s32.totalorder %s40, 0
        // Predicated region
        $region29: #{tpu_custom_call.1} parent=23 // pred_check
          %p206 = pneg %p205
        $region30: #{tpu_custom_call.1} parent=23 // pred_check_branch
          %208 = sbr.rel (%p206) target = $region32
        $region31: #{tpu_custom_call.1} parent=23 // pred_region
          %v209 = vld [vmem:[%s177] sm:$0xff]
          %210 = vst [vmem:[%s196] sm:$0xff] %v209
        $region32: #{tpu_custom_call.1} parent=23 // pred_fallthru
          _
        %p211 = scmp.gt.s32.totalorder %s40, 0
        // Predicated region
        $region33: #{tpu_custom_call.1} parent=23 // pred_check
          %p212 = pneg %p211
        $region34: #{tpu_custom_call.1} parent=23 // pred_check_branch
          %214 = sbr.rel (%p212) target = $region36
        $region35: #{tpu_custom_call.1} parent=23 // pred_region
          %v215 = vld [vmem:[%s196] sm:$0xff]
          %v216 = vld [vmem:[%s177] sm:$0xff]
          %v217 = vmax.f32 %v215, %v216
          %218 = vst [vmem:[%s196] sm:$0xff] %v217
        $region36: #{tpu_custom_call.1} parent=23 // pred_fallthru
          _
        %s219 = sand.u32 %s106, 1
        %s220 = scalar_lea.sflag [#allocation7], %s219
        %s221 = sand.u32 %s106, 1
        %s222 = smul.addr %s221, 8
        %s223 = scalar_lea.vmem [#allocation8], %s222
        // Predicated region
        $region37: #{tpu_custom_call.1} parent=23 // pred_check
          %p224 = pneg %p116
        $region38: #{tpu_custom_call.1} parent=23 // pred_check_branch
          %226 = sbr.rel (%p224) target = $region40
        $region39: #{tpu_custom_call.1} parent=23 // pred_region
          %228 = vsyncadd %s220, 0
          %s229 = sadd.s32 %s39, %s38
          %s230 = smul.addr %s229, 8
          %s231 = scalar_lea.hbm %s3, %s230
          %s233 = sshll.u32 %s223, 4
          %s234 = int_to_ptr.vmem [resolvable:$true] %s233
          %s235 = sshll.u32 %s231, 4
          %s236 = int_to_ptr.hbm [resolvable:$true] %s235
          %238 = dma.vmem_to_hbm [thread:$0]  %s234, 128, %s236, %s220
        $region40: #{tpu_custom_call.1} parent=23 // pred_fallthru
          _
      $region24: #{tpu_custom_call.1} parent=5 // pred_fallthru
        _
      %p239 = scmp.le.s32.totalorder 2, %s28
      // Predicated region
      $region41: #{tpu_custom_call.1} parent=5 // pred_check
        %p240 = pneg %p239
      $region42: #{tpu_custom_call.1} parent=5 // pred_check_branch
        %242 = sbr.rel (%p240) target = $region44
      $region43: #{tpu_custom_call.1} parent=5 // pred_region
        %s243 = ssub.s32 %s28, 2
        // Predicated region
        $region45: #{tpu_custom_call.1} parent=43 // pred_check
          %p244 = pneg %p122
        $region46: #{tpu_custom_call.1} parent=43 // pred_check_branch
          %246 = sbr.rel (%p244) target = $region48
        $region47: #{tpu_custom_call.1} parent=43 // pred_region
          %s247 = sand.u32 %s107, 1
          %s248 = scalar_lea.sflag [#allocation7], %s247
          %s249 = sand.u32 %s107, 1
          %s250 = smul.addr %s249, 8
          %s251 = scalar_lea.vmem [#allocation8], %s250
          %253 = dma.done %s248, 128
        $region48: #{tpu_custom_call.1} parent=43 // pred_fallthru
          _
      $region44: #{tpu_custom_call.1} parent=5 // pred_fallthru
        _
    $region6: #{tpu_custom_call.1} parent=1 // loop_footer
      %s32 = sadd.s32 1, %s28
    $region7: #{tpu_custom_call.1} parent=1 // loop_footer_branch
      %27 = sbr.rel target = $region3
    $region8: #{tpu_custom_call.1} parent=1 // loop_exit
      _
    %254 = vsyncpa [#allocation6], 1
    %s255 = scalar_lea.sflag [#allocation6], 1
    %256 = vsyncpa %s255, 1
    %257 = vsyncpa [#allocation7], 1
    %s258 = scalar_lea.sflag [#allocation7], 1
    %259 = vsyncpa %s258, 1

</llo_original>
